<compile_context>
chip_gen: v7x
topology: tpu7x:2x2x1
jax: 0.10.0
libtpu: 0.0.40
codegen_flags: <defaults>
</compile_context>

<pallas_src>
import functools

import jax
import jax.numpy as jnp
import numpy as np
from jax.experimental import pallas as pl
from jax.experimental.pallas import tpu as pltpu

LN_EPS = 1e-5  # F.layer_norm default eps


# ---------------------------------------------------------------------------
# pltpu.roll direction probe (run once, eagerly, before jit)
# ---------------------------------------------------------------------------
def _roll_matches_numpy() -> bool:
    """True iff pltpu.roll(x, s, axis) == np.roll(x, s, axis) (elements move
    toward higher indices).  One tiny eager kernel, executed once at setup."""
    def k(x_ref, o_ref):
        o_ref[...] = pltpu.roll(x_ref[...], 1, 1)

    x = jnp.arange(8 * 128, dtype=jnp.float32).reshape(8, 128)
    y = pl.pallas_call(k, out_shape=jax.ShapeDtypeStruct((8, 128), jnp.float32))(x)
    return bool(y[0, 1] == x[0, 0])


# ---------------------------------------------------------------------------
# Depthwise-conv boundary masks (host-side numpy constant, (9, H*W) f32)
# ---------------------------------------------------------------------------
def _dw_boundary_masks(H, W):
    """masks[3*ky+kx, p] = 1 iff the 3x3 tap (ky-1, kx-1) taken at flat position
    p stays inside the HxW image (zero-padding semantics).  Also zeroes every
    tap whose flat roll would cross a row / image / sample boundary."""
    HW = H * W
    yy, xx = np.divmod(np.arange(HW), W)
    m = np.zeros((9, HW), np.float32)
    for ky in range(3):
        for kx in range(3):
            dy, dx = ky - 1, kx - 1
            ok = (yy + dy >= 0) & (yy + dy < H) & (xx + dx >= 0) & (xx + dx < W)
            m[3 * ky + kx] = ok.astype(np.float32)
    return m


def _round_up(v, m):
    return (v + m - 1) // m * m


def _choose_samples_per_step(N):
    """Samples folded into the lane axis per grid step.  Keep >= 2 grid steps
    (v7x has 2 TensorCores) and cap per-step VMEM growth (mdw slab scales ~B)."""
    if N <= 2:
        return 1
    best = 1
    for b in range(1, min(N // 2, 4) + 1):
        if N % b == 0:
            best = b
    return best


# ---------------------------------------------------------------------------
# Host-side slab packing (runs inside the jitted wrapper, outside the kernel)
# ---------------------------------------------------------------------------
def _build_slabs(params, masks_tiled, L):
    """Pack every weight/bias into one (rows, 128) slab and every fused
    mask*depthwise tensor into one (rows, L) slab.  Returns both slabs plus
    static (row_offset, rows, cols) / (row_offset, cin, cin_pad) metadata
    tuples in the exact order the kernel consumes them."""
    w_pieces, w_slots, w_rows = [], [], [0]

    def add_w(a):
        a = jnp.asarray(a, jnp.float32)
        if a.ndim == 1:
            a = a.reshape(-1, 1)
        r, c = a.shape
        rp = _round_up(r, 8)
        w_pieces.append(jnp.pad(a, ((0, rp - r), (0, 128 - c))))
        w_slots.append((w_rows[0], r, c))
        w_rows[0] += rp

    m_pieces, m_slots, m_rows = [], [], [0]

    def add_mdw(dw):
        cin = dw.shape[0]
        dw9 = jnp.asarray(dw, jnp.float32).reshape(cin, 9)
        cp = _round_up(cin, 8)
        taps = []
        for t in range(9):
            blk = masks_tiled[t][None, :] * dw9[:, t][:, None]   # (cin, L)
            taps.append(jnp.pad(blk, ((0, cp - cin), (0, 0))))
        m_pieces.append(jnp.concatenate(taps, axis=0))           # (9*cp, L)
        m_slots.append((m_rows[0], cin, cp))
        m_rows[0] += 9 * cp

    def add_c(p):                       # 1x1 conv
        add_w(p["w"]); add_w(p["b"])

    def add_s(p):                       # separable conv
        add_mdw(p["dw"]); add_w(p["db"]); add_w(p["pw"]); add_w(p["pb"])

    add_c(params["branch1x1"])
    add_c(params["branch3x3_1"]);    add_s(params["branch3x3_2"])
    add_c(params["branch3x3dbl_1"]); add_s(params["branch3x3dbl_2"]); add_s(params["branch3x3dbl_3"])
    add_c(params["branch3x3db7_1"]); add_s(params["branch3x3db7_2"])
    add_s(params["branch3x3db7_3"]); add_s(params["branch3x3db7_4"])
    add_w(params["out1x1"]["w"]); add_w(params["out1x1"]["b"])

    return (jnp.concatenate(w_pieces, axis=0),
            jnp.concatenate(m_pieces, axis=0),
            tuple(w_slots), tuple(m_slots))


# ---------------------------------------------------------------------------
# The fused kernel (one grid step == B samples)
# ---------------------------------------------------------------------------
def _inception_kernel(x_ref, w_ref, mdw_ref, o_ref, *,
                      B, H, W, w_slots, mdw_slots, roll_np_like):
    HW = H * W
    L = B * HW
    x = x_ref[0]                      # (Cin, L): channels on sublanes, B*HW on lanes

    wit = iter(w_slots)               # static metadata, consumed in fixed order
    mit = iter(mdw_slots)

    def wload():
        off, r, c = next(wit)
        return w_ref[off:off + r, 0:c]

    def ln_relu(y):
        # Per-sample LayerNorm over all of (C, H, W) == F.layer_norm(x, x.size()[1:]),
        # no affine, eps=1e-5.  Two-pass mean/variance, per 256-lane sample segment.
        C = y.shape[0]
        inv_n = 1.0 / float(C * HW)
        segs = []
        for b in range(B):
            seg = y[:, b * HW:(b + 1) * HW]
            mu = jnp.sum(jnp.sum(seg, axis=1, keepdims=True),
                         axis=0, keepdims=True) * inv_n
            d = seg - mu
            var = jnp.sum(jnp.sum(d * d, axis=1, keepdims=True),
                          axis=0, keepdims=True) * inv_n
            segs.append(jnp.maximum(d * jax.lax.rsqrt(var + LN_EPS), 0.0))
        return segs[0] if B == 1 else jnp.concatenate(segs, axis=1)

    def conv1x1_ln_relu(z):
        w = wload()                                           # (Cout, Cz)
        b = wload()                                           # (Cout, 1)
        return ln_relu(jnp.dot(w, z, preferred_element_type=jnp.float32) + b)

    def sepconv_ln_relu(z):
        base, cin, cpad = next(mit)
        db = wload()                                          # (cin, 1)
        pw = wload()                                          # (Cout, cin)
        pb = wload()                                          # (Cout, 1)
        acc = None
        for ky in range(3):
            for kx in range(3):
                t = 3 * ky + kx
                delta = (ky - 1) * W + (kx - 1)               # flat spatial offset
                if delta == 0:
                    shifted = z
                else:
                    shift = (-delta) % L if roll_np_like else delta % L
                    shifted = pltpu.roll(z, shift, 1)         # XLU lane rotate
                r0 = base + t * cpad
                contrib = shifted * mdw_ref[r0:r0 + cin, :]   # mask*dw pre-fused
                acc = contrib if acc is None else acc + contrib
        acc = acc + db
        y = jnp.dot(pw, acc, preferred_element_type=jnp.float32) + pb
        return ln_relu(y)

    # Four branches (slabs consumed in exactly the _build_slabs order).
    y1 = conv1x1_ln_relu(x)
    y2 = sepconv_ln_relu(conv1x1_ln_relu(x))
    y3 = sepconv_ln_relu(sepconv_ln_relu(conv1x1_ln_relu(x)))
    y4 = sepconv_ln_relu(sepconv_ln_relu(sepconv_ln_relu(conv1x1_ln_relu(x))))

    # out1x1 over the concat [y1|y2|y3|y4] as ONE K=4*oc matmul: each y is an
    # (oc, L) f32 tile, so the sublane stack is layout-aligned and cheap.
    ycat = jnp.concatenate([y1, y2, y3, y4], axis=0)          # (4*oc, L)
    wo = wload()                                              # (oc, 4*oc)
    bo = wload()                                              # (oc, 1)
    out = jnp.dot(wo, ycat, preferred_element_type=jnp.float32) + bo
    o_ref[0] = out.astype(o_ref.dtype)


# ---------------------------------------------------------------------------
# Wrapper
# ---------------------------------------------------------------------------
def _cost_estimate(N, Cin, HW, oc, weight_bytes):
    flops = 0
    for cin, cout in [(Cin, oc), (Cin, 4), (Cin, 4), (Cin, 4)]:              # 1x1 convs
        flops += 2 * cin * cout * HW + 8 * cout * HW
    for cin, cout in [(4, oc), (4, 8), (8, oc), (4, 8), (8, 16), (16, oc)]:  # sepconvs
        flops += 20 * cin * HW + 2 * cin * cout * HW + 8 * cout * HW
    flops += 2 * (4 * oc) * oc * HW + oc * HW                                # out1x1
    flops *= N
    bytes_accessed = N * (Cin + oc) * HW * 4 + weight_bytes
    return pl.CostEstimate(flops=int(flops), transcendentals=int(10 * N),
                           bytes_accessed=int(bytes_accessed))


def make_forward():
    """Probes the pltpu.roll convention once, returns a jitted NCHW->NCHW forward."""
    roll_np_like = _roll_matches_numpy()

    def forward(x_nchw, params):
        N, Cin, H, W = x_nchw.shape
        HW = H * W
        oc = params["out1x1"]["w"].shape[0]
        B = _choose_samples_per_step(N)       # samples per grid step
        G = N // B                            # grid steps
        L = B * HW

        if B == 1:
            x = x_nchw.reshape(G, Cin, L).astype(jnp.float32)         # no transpose
        else:
            x = (x_nchw.reshape(G, B, Cin, HW)
                 .transpose(0, 2, 1, 3)
                 .reshape(G, Cin, L).astype(jnp.float32))

        masks_tiled = jnp.asarray(np.tile(_dw_boundary_masks(H, W), (1, B)))  # (9, L)
        w_slab, mdw_slab, w_slots, mdw_slots = _build_slabs(params, masks_tiled, L)
        weight_bytes = (w_slab.size + mdw_slab.size) * 4

        kern = functools.partial(
            _inception_kernel, B=B, H=H, W=W,
            w_slots=w_slots, mdw_slots=mdw_slots, roll_np_like=roll_np_like)

        out = pl.pallas_call(
            kern,
            out_shape=jax.ShapeDtypeStruct((G, oc, L), jnp.float32),
            grid=(G,),
            in_specs=[
                pl.BlockSpec((1, Cin, L), lambda n: (n, 0, 0)),
                # Both slabs: full-array blocks with constant index maps -> one DMA each.
                pl.BlockSpec(w_slab.shape, lambda n: (0, 0)),
                pl.BlockSpec(mdw_slab.shape, lambda n: (0, 0)),
            ],
            out_specs=pl.BlockSpec((1, oc, L), lambda n: (n, 0, 0)),
            compiler_params=pltpu.CompilerParams(
                dimension_semantics=("parallel",)),                  # 2 TCs on v7x
            cost_estimate=_cost_estimate(N, Cin, HW, oc, weight_bytes),
        )(x, w_slab, mdw_slab)

        if B == 1:
            return out.reshape(N, oc, H, W)                          # no transpose
        return (out.reshape(G, oc, B, HW)
                .transpose(0, 2, 1, 3)
                .reshape(N, oc, H, W))

    return jax.jit(forward)


# ---------------------------------------------------------------------------
# Synthetic params (PyTorch-shaped) + pure-JAX reference for validation
# ---------------------------------------------------------------------------
def init_params(key, in_ch, out_ch):
    keys = iter(jax.random.split(key, 64))

    def nrm(shape, scale=0.1):
        return jax.random.normal(next(keys), shape, jnp.float32) * scale

    def conv1x1_p(cin, cout):
        return {"w": nrm((cout, cin)), "b": nrm((cout,))}

    def sep_p(cin, cout):
        return {"dw": nrm((cin, 3, 3)), "db": nrm((cin,)),
                "pw": nrm((cout, cin)), "pb": nrm((cout,))}

    return {
        "branch1x1": conv1x1_p(in_ch, out_ch),
        "branch3x3_1": conv1x1_p(in_ch, 4),
        "branch3x3_2": sep_p(4, out_ch),
        "branch3x3dbl_1": conv1x1_p(in_ch, 4),
        "branch3x3dbl_2": sep_p(4, 8),
        "branch3x3dbl_3": sep_p(8, out_ch),
        "branch3x3db7_1": conv1x1_p(in_ch, 4),
        "branch3x3db7_2": sep_p(4, 8),
        "branch3x3db7_3": sep_p(8, 16),
        "branch3x3db7_4": sep_p(16, out_ch),
        "out1x1": conv1x1_p(out_ch * 4, out_ch),
    }


def _reference_forward(x, params):
    """Pure-JAX (non-Pallas) reference of the PyTorch forward, NCHW."""
    N, Cin, H, W = x.shape

    def conv1x1(z, p):
        return jnp.einsum("oc,nchw->nohw", p["w"], z) + p["b"][None, :, None, None]

    def ln_relu(z):
        mu = z.mean(axis=(1, 2, 3), keepdims=True)
        var = jnp.square(z - mu).mean(axis=(1, 2, 3), keepdims=True)
        return jnp.maximum((z - mu) * jax.lax.rsqrt(var + LN_EPS), 0.0)

    def sep(z, p):
        zp = jnp.pad(z, ((0, 0), (0, 0), (1, 1), (1, 1)))
        acc = jnp.zeros_like(z)
        for ky in range(3):
            for kx in range(3):
                acc = acc + zp[:, :, ky:ky + H, kx:kx + W] * p["dw"][None, :, ky, kx, None, None]
        acc = acc + p["db"][None, :, None, None]
        y = jnp.einsum("oc,nchw->nohw", p["pw"], acc) + p["pb"][None, :, None, None]
        return ln_relu(y)

    def c(z, p):
        return ln_relu(conv1x1(z, p))

    y1 = c(x, params["branch1x1"])
    y2 = sep(c(x, params["branch3x3_1"]), params["branch3x3_2"])
    y3 = sep(sep(c(x, params["branch3x3dbl_1"]), params["branch3x3dbl_2"]),
             params["branch3x3dbl_3"])
    t = c(x, params["branch3x3db7_1"])
    t = sep(t, params["branch3x3db7_2"])
    t = sep(t, params["branch3x3db7_3"])
    y4 = sep(t, params["branch3x3db7_4"])
    cat = jnp.concatenate([y1, y2, y3, y4], axis=1)
    return (jnp.einsum("oc,nchw->nohw", params["out1x1"]["w"], cat)
            + params["out1x1"]["b"][None, :, None, None])


if __name__ == "__main__":
    key = jax.random.PRNGKey(0)
    kx, kp = jax.random.split(key)
    N, Cin, H, W = 2, 4, 16, 16
    out_ch = 8
    x = jax.random.normal(kx, (N, Cin, H, W), jnp.float32)
    params = init_params(kp, Cin, out_ch)

    forward = make_forward()
    out = forward(x, params)
    jax.block_until_ready(out)
    assert out.shape == (N, out_ch, H, W), out.shape
    assert bool(jnp.all(jnp.isfinite(out)))

    ref = _reference_forward(x, params)
    max_err = float(jnp.max(jnp.abs(out - ref)))
    assert max_err < 1e-3, f"mismatch vs pure-JAX reference: {max_err}"
    print("KERNEL_OK")
</pallas_src>

<mosaic_0001>
module attributes {stable_mosaic.version = 11 : i64} {
  func.func @k(%arg0: memref<8x128xf32, #tpu.memory_space<vmem>>, %arg1: memref<8x128xf32, #tpu.memory_space<vmem>>) attributes {dimension_semantics = [], scalar_prefetch = 0 : i64, scratch_operands = 0 : i64, tpu.core_type = #tpu.core_type<tc>} {
    %c0 = arith.constant 0 : index
    %c0_0 = arith.constant 0 : index
    %0 = vector.load %arg0[%c0, %c0_0] : memref<8x128xf32, #tpu.memory_space<vmem>>, vector<8x128xf32>
    %c1_i32 = arith.constant 1 : i32
    %1 = tpu.dynamic_rotate %0 by %c1_i32 dim 1 : vector<8x128xf32>, i32 -> vector<8x128xf32>
    %c0_1 = arith.constant 0 : index
    %c0_2 = arith.constant 0 : index
    %2 = vector.load %arg1[%c0_1, %c0_2] : memref<8x128xf32, #tpu.memory_space<vmem>>, vector<8x128xf32>
    tpu.vector_store %arg1[%c0_1, %c0_2], %1 {strides = array<i32>} : memref<8x128xf32, #tpu.memory_space<vmem>>, vector<8x128xf32>,
    return
  }
}

</mosaic_0001>

<llo_original>
// kernel: tpu_custom_call.1
$region0: #{tpu_custom_call.1}
  #allocation0 [shape = 'u32[]', space=smem, size = 0x4, offset = 0x4, fixed_abs, tag = 'smem constant byte address 0x4 - core index']
  #allocation1 [shape = 'u32[144,128]{1,0:T(1,128)}', space=vmem, size = 0x12000, scoped, tag = 'internal scratch']
  %s0 = inlined_call_operand.hbm [shape: f32[8,128], index: 0, kind: input, shape index: {}]
  %s1 = inlined_call_operand.hbm [shape: f32[8,128], index: 1, kind: output, shape index: {}]
  %s2 = sld [smem:[#allocation0]]
  $region18: #{tpu_custom_call.1} parent=0
    _
  %s4 = ssub.s32 1, %s2
  %s5 = scalar_select 0, %s4, %s2
  $region1: #{tpu_custom_call.1} parent=0
    #allocation2 [shape = 'u8[4096]{0}', space=vmem, size = 0x1000, scoped, tag = 'input window, operand 0, single buffered']
    #allocation3 [shape = 's32[1]{0}', space=sflag, size = 0x4, scoped, tag = 'scoped memory for tpu_custom_call.1']
    #allocation4 [shape = 's32[1]{0}', space=sflag, size = 0x4, scoped, tag = 'scoped memory for tpu_custom_call.1']
    #allocation5 [shape = 'u8[4096]{0}', space=vmem, size = 0x1000, scoped, tag = 'output window, operand 0, single buffered']
    %6 = vsyncpa [#allocation3], 0
    %7 = vsyncpa [#allocation4], 0
    // Predicated region
    $region2: #{tpu_custom_call.1} parent=1 // pred_check
      _
    $region3: #{tpu_custom_call.1} parent=1 // pred_check_branch
      %9 = sbr.rel (0) target = $region5
    $region4: #{tpu_custom_call.1} parent=1 // pred_region
      %s11 = ssub.s32 128, 128
      %12 = vsyncadd [#allocation3], %s11
      %s14 = sshll.u32 [#allocation2], 4
      %s15 = int_to_ptr.vmem [resolvable:$true] %s14
      %17 = dma.hbm_to_vmem [thread:$0]  %s0, 128, %s15, [#allocation3]
    $region5: #{tpu_custom_call.1} parent=1 // pred_fallthru
      _
    // Predicated region
    $region6: #{tpu_custom_call.1} parent=1 // pred_check
      _
    $region7: #{tpu_custom_call.1} parent=1 // pred_check_branch
      %19 = sbr.rel (0) target = $region9
    $region8: #{tpu_custom_call.1} parent=1 // pred_region
      %20 = dma.done [#allocation3], 128
    $region9: #{tpu_custom_call.1} parent=1 // pred_fallthru
      _
    %v21 = vld [vmem:[#allocation2] sm:$0xff]
    %22 = vrot.lane.b32.xlu0 %v21, 1
    %v23 = vpop.permute.xlu0 %22
    %24 = vst [vmem:[#allocation5] sm:$0xff] %v23
    // Predicated region
    $region10: #{tpu_custom_call.1} parent=1 // pred_check
      _
    $region11: #{tpu_custom_call.1} parent=1 // pred_check_branch
      %26 = sbr.rel (0) target = $region13
    $region12: #{tpu_custom_call.1} parent=1 // pred_region
      %s28 = ssub.s32 128, 128
      %29 = vsyncadd [#allocation4], %s28
      %s31 = sshll.u32 [#allocation5], 4
      %s32 = int_to_ptr.vmem [resolvable:$true] %s31
      %34 = dma.vmem_to_hbm [thread:$0]  %s32, 128, %s1, [#allocation4]
    $region13: #{tpu_custom_call.1} parent=1 // pred_fallthru
      _
    // Predicated region
    $region14: #{tpu_custom_call.1} parent=1 // pred_check
      _
    $region15: #{tpu_custom_call.1} parent=1 // pred_check_branch
      %36 = sbr.rel (0) target = $region17
    $region16: #{tpu_custom_call.1} parent=1 // pred_region
      %37 = dma.done [#allocation4], 128
    $region17: #{tpu_custom_call.1} parent=1 // pred_fallthru
      _
    %38 = vsyncpa [#allocation3], 1
    %39 = vsyncpa [#allocation4], 1

</llo_original>
